<compile_context>
chip_gen: v7x
topology: tpu7x:2x2x1
jax: 0.10.0
libtpu: 0.0.40
codegen_flags: <defaults>
</compile_context>

<pallas_src>
import jax
import jax.numpy as jnp
import numpy as np
from jax.experimental import pallas as pl
from jax.experimental.pallas import tpu as pltpu

BN_EPS = 1e-5  # torch.nn.BatchNorm1d default


def _round_up(x, m):
    return (x + m - 1) // m * m


def _make_prober_kernel(num_hidden):
    """Refs ordered: [x, (W', shift) * num_hidden, w_last, out]."""

    def kernel(*refs):
        x_ref = refs[0]
        out_ref = refs[-1]
        # Cast activations to bf16 right next to the MXU (avoids an extra wrapper pass
        # over `e` in HBM); accumulation stays f32 via preferred_element_type.
        h = x_ref[...].astype(jnp.bfloat16)                     # (BLK_B, E)
        idx = 1
        for _ in range(num_hidden):                             # unrolled at trace time
            w = refs[idx][...]                                  # (in, hid) bf16, BN scale folded in
            shift = refs[idx + 1][...]                          # (1, hid)  f32, bias+BN folded
            idx += 2
            a = jnp.dot(h, w, preferred_element_type=jnp.float32)
            h = jnp.maximum(a + shift, 0.0).astype(jnp.bfloat16)  # BN shift + ReLU in f32
        w_last = refs[idx][...]                                 # (hid, out_pad) bf16
        out_ref[...] = jnp.dot(
            h, w_last, preferred_element_type=jnp.float32).astype(out_ref.dtype)

    return kernel


def prepare_prober_params(params, *, param_dtype=jnp.bfloat16):
    """One-time fold of Linear bias + BatchNorm(eval) into (W', shift), bf16 cast,
    and lane-density padding of the final projection. Cache the result with the model."""
    hidden = []
    for layer in params["hidden"]:
        s = layer["gamma"] * jax.lax.rsqrt(layer["var"] + BN_EPS)           # (hid,)
        shift = layer["beta"] + (layer["bias"] - layer["mean"]) * s         # (hid,)
        w = (layer["w"] * s[None, :]).astype(param_dtype)                   # scale folded into cols
        hidden.append((w, shift.reshape(1, -1).astype(jnp.float32)))

    out_dim = params["w_last"].shape[1]
    out_pad = _round_up(out_dim, 128)                                       # lane-dense stores
    w_last = params["w_last"]
    if out_pad != out_dim:
        w_last = jnp.pad(w_last, ((0, 0), (0, out_pad - out_dim)))
    w_last = w_last.astype(param_dtype)

    return {"hidden": hidden, "w_last": w_last, "out_dim": out_dim, "out_pad": out_pad}


def prober_forward(e, prep, output_shape, *, blk_b=512):
    """e: (B, embedding). prep: output of prepare_prober_params. Returns (B, *output_shape)."""
    B, E = e.shape
    hidden = prep["hidden"]
    num_hidden = len(hidden)
    out_dim, out_pad = prep["out_dim"], prep["out_pad"]
    assert out_dim == int(np.prod(output_shape))

    weight_args = []
    for w, shift in hidden:
        weight_args += [w, shift]
    weight_args.append(prep["w_last"])

    # ---- batch blocking: large blocks amortize the ~0.35us/step overhead, but keep
    # grid >= 2 when the batch allows so v7x's two TensorCores both get work. ----
    B8 = _round_up(B, 8)
    blk_b = min(max(blk_b, 8), B8)
    if B8 >= 16:
        blk_b = min(blk_b, _round_up(-(-B8 // 2), 8))
    blk_b = _round_up(blk_b, 8)
    grid = (pl.cdiv(B, blk_b),)                      # boundary block masked by Pallas

    in_specs = [pl.BlockSpec((blk_b, E), lambda b: (b, 0))]        # activations
    # Weights/shifts: full-extent blocks with constant index_map -> stay resident in
    # VMEM across the whole grid (no re-DMA between consecutive steps).
    for w in weight_args:
        in_specs.append(pl.BlockSpec(w.shape, lambda b: (0, 0)))

    # ---- explicit VMEM budget (double-buffered activations + resident weights +
    # the largest f32 intermediate), so large blk_b doesn't trip the scoped default ----
    max_hidden = max([w.shape[1] for w, _ in hidden] + [out_pad])
    act_bytes = 2 * blk_b * E * 4 + 2 * blk_b * out_pad * 4
    weight_bytes = 2 * sum(int(np.prod(w.shape)) * w.dtype.itemsize for w in weight_args)
    inter_bytes = 2 * blk_b * max_hidden * 4
    vmem_limit = int(min(max(1.5 * (act_bytes + weight_bytes + inter_bytes),
                             16 << 20), 64 << 20))

    out = pl.pallas_call(
        _make_prober_kernel(num_hidden),
        out_shape=jax.ShapeDtypeStruct((B, out_pad), e.dtype),
        grid_spec=pltpu.PrefetchScalarGridSpec(
            num_scalar_prefetch=0,
            grid=grid,
            in_specs=in_specs,
            out_specs=pl.BlockSpec((blk_b, out_pad), lambda b: (b, 0)),  # lane-dense store
        ),
        compiler_params=pltpu.CompilerParams(
            dimension_semantics=("parallel",),        # megacore sharding of the batch axis
            vmem_limit_bytes=vmem_limit),
    )(e, *weight_args)

    if out_pad != out_dim:
        out = out[:, :out_dim]
    return out.reshape((B,) + tuple(output_shape))


# ---------------- pure-JAX reference (mirrors torch eval-mode forward) -------------
def reference_prober(e, params, output_shape):
    h = e
    for layer in params["hidden"]:
        h = h @ layer["w"] + layer["bias"]
        h = (h - layer["mean"]) / jnp.sqrt(layer["var"] + BN_EPS) * layer["gamma"] \
            + layer["beta"]
        h = jnp.maximum(h, 0.0)
    h = h @ params["w_last"]
    return h.reshape((e.shape[0],) + tuple(output_shape))


def init_params(key, embedding, arch_list, out_dim):
    dims = [embedding] + list(arch_list)
    params = {"hidden": []}
    for i in range(len(dims) - 1):
        key, kw, kb, kg, kbe, km, kv = jax.random.split(key, 7)
        fin, fout = dims[i], dims[i + 1]
        params["hidden"].append({
            "w": 0.05 * jax.random.normal(kw, (fin, fout), jnp.float32),
            "bias": 0.05 * jax.random.normal(kb, (fout,), jnp.float32),
            "gamma": 1.0 + 0.1 * jax.random.normal(kg, (fout,), jnp.float32),
            "beta": 0.1 * jax.random.normal(kbe, (fout,), jnp.float32),
            "mean": 0.1 * jax.random.normal(km, (fout,), jnp.float32),
            "var": 0.5 + jnp.abs(jax.random.normal(kv, (fout,), jnp.float32)),
        })
    key, kl = jax.random.split(key)
    params["w_last"] = 0.05 * jax.random.normal(kl, (dims[-1], out_dim), jnp.float32)
    return params


if __name__ == "__main__":
    # Prober(embedding=64, arch="256-128", output_shape=[4, 32])
    EMBEDDING = 64
    ARCH = [256, 128]
    OUTPUT_SHAPE = [4, 32]
    OUT_DIM = int(np.prod(OUTPUT_SHAPE))
    B = 256  # blk_b auto-caps to 128 -> grid of 2 (exercises megacore path)

    key = jax.random.PRNGKey(0)
    ke, kp = jax.random.split(key)
    e = jax.random.normal(ke, (B, EMBEDDING), jnp.float32)
    params = init_params(kp, EMBEDDING, ARCH, OUT_DIM)

    prep = prepare_prober_params(params)              # one-time BN fold + bf16 cast
    out = prober_forward(e, prep, OUTPUT_SHAPE)
    out = jax.block_until_ready(out)

    ref = jax.block_until_ready(reference_prober(e, params, OUTPUT_SHAPE))
    assert out.shape == (B,) + tuple(OUTPUT_SHAPE)
    # bf16 matmul operands (f32 accumulation) -> tolerance loosened vs the f32 reference.
    max_err = jnp.max(jnp.abs(out - ref))
    assert max_err < 2e-2, f"max abs err {max_err}"

    # TODO(synk): BatchNorm1d is implemented in inference mode (running stats);
    # training-mode batch statistics / running-stat updates are not computed.
    print("KERNEL_OK")
</pallas_src>

<mosaic_0001>
module attributes {stable_mosaic.version = 11 : i64} {
  func.func @kernel(%arg0: i32, %arg1: memref<128x64xf32, #tpu.memory_space<vmem>>, %arg2: memref<64x256xbf16, #tpu.memory_space<vmem>>, %arg3: memref<1x256xf32, #tpu.memory_space<vmem>>, %arg4: memref<256x128xbf16, #tpu.memory_space<vmem>>, %arg5: memref<1x128xf32, #tpu.memory_space<vmem>>, %arg6: memref<128x128xbf16, #tpu.memory_space<vmem>>, %arg7: memref<128x128xf32, #tpu.memory_space<vmem>>) attributes {dimension_semantics = [#tpu.dimension_semantics<parallel>], iteration_bounds = array<i64: 2>, scalar_prefetch = 0 : i64, scratch_operands = 0 : i64, tpu.core_type = #tpu.core_type<tc>, window_params = [{transform_indices = @transform_0, window_bounds = array<i64: 128, 64>}, {pipeline_mode = #tpu.pipeline_mode<synchronous>, transform_indices = @transform_1, window_bounds = array<i64: 64, 256>}, {pipeline_mode = #tpu.pipeline_mode<synchronous>, transform_indices = @transform_2, window_bounds = array<i64: 1, 256>}, {pipeline_mode = #tpu.pipeline_mode<synchronous>, transform_indices = @transform_3, window_bounds = array<i64: 256, 128>}, {pipeline_mode = #tpu.pipeline_mode<synchronous>, transform_indices = @transform_4, window_bounds = array<i64: 1, 128>}, {pipeline_mode = #tpu.pipeline_mode<synchronous>, transform_indices = @transform_5, window_bounds = array<i64: 128, 128>}, {transform_indices = @transform_6, window_bounds = array<i64: 128, 128>}]} {
    %c0 = arith.constant 0 : index
    %c0_0 = arith.constant 0 : index
    %0 = vector.load %arg1[%c0, %c0_0] : memref<128x64xf32, #tpu.memory_space<vmem>>, vector<128x64xf32>
    %1 = arith.truncf %0 : vector<128x64xf32> to vector<128x64xbf16>
    %c0_1 = arith.constant 0 : index
    %c0_2 = arith.constant 0 : index
    %2 = vector.load %arg2[%c0_1, %c0_2] : memref<64x256xbf16, #tpu.memory_space<vmem>>, vector<64x256xbf16>
    %c0_3 = arith.constant 0 : index
    %c0_4 = arith.constant 0 : index
    %3 = vector.load %arg3[%c0_3, %c0_4] : memref<1x256xf32, #tpu.memory_space<vmem>>, vector<1x256xf32>
    %cst = arith.constant dense<0.000000e+00> : vector<128x256xf32>
    %4 = tpu.matmul %1, %2, %cst {dimension_numbers = #tpu.dot_dimension_numbers<[1], [0], [0], [1], [0, 0, 1, 1], [], []>} : vector<128x64xbf16>, vector<64x256xbf16>, vector<128x256xf32> -> vector<128x256xf32>
    %5 = vector.broadcast %3 : vector<1x256xf32> to vector<128x256xf32>
    %6 = arith.addf %4, %5 : vector<128x256xf32>
    %cst_5 = arith.constant 0.000000e+00 : f32
    %7 = vector.broadcast %cst_5 : f32 to vector<128x256xf32>
    %8 = arith.maximumf %6, %7 : vector<128x256xf32>
    %9 = arith.truncf %8 : vector<128x256xf32> to vector<128x256xbf16>
    %c0_6 = arith.constant 0 : index
    %c0_7 = arith.constant 0 : index
    %10 = vector.load %arg4[%c0_6, %c0_7] : memref<256x128xbf16, #tpu.memory_space<vmem>>, vector<256x128xbf16>
    %c0_8 = arith.constant 0 : index
    %c0_9 = arith.constant 0 : index
    %11 = vector.load %arg5[%c0_8, %c0_9] : memref<1x128xf32, #tpu.memory_space<vmem>>, vector<1x128xf32>
    %cst_10 = arith.constant dense<0.000000e+00> : vector<128x128xf32>
    %12 = tpu.matmul %9, %10, %cst_10 {dimension_numbers = #tpu.dot_dimension_numbers<[1], [0], [0], [1], [0, 0, 1, 1], [], []>} : vector<128x256xbf16>, vector<256x128xbf16>, vector<128x128xf32> -> vector<128x128xf32>
    %13 = vector.broadcast %11 : vector<1x128xf32> to vector<128x128xf32>
    %14 = arith.addf %12, %13 : vector<128x128xf32>
    %cst_11 = arith.constant 0.000000e+00 : f32
    %15 = vector.broadcast %cst_11 : f32 to vector<128x128xf32>
    %16 = arith.maximumf %14, %15 : vector<128x128xf32>
    %17 = arith.truncf %16 : vector<128x128xf32> to vector<128x128xbf16>
    %c0_12 = arith.constant 0 : index
    %c0_13 = arith.constant 0 : index
    %18 = vector.load %arg6[%c0_12, %c0_13] : memref<128x128xbf16, #tpu.memory_space<vmem>>, vector<128x128xbf16>
    %cst_14 = arith.constant dense<0.000000e+00> : vector<128x128xf32>
    %19 = tpu.matmul %17, %18, %cst_14 {dimension_numbers = #tpu.dot_dimension_numbers<[1], [0], [0], [1], [0, 0, 1, 1], [], []>} : vector<128x128xbf16>, vector<128x128xbf16>, vector<128x128xf32> -> vector<128x128xf32>
    %c0_15 = arith.constant 0 : index
    %c0_16 = arith.constant 0 : index
    %20 = vector.load %arg7[%c0_15, %c0_16] : memref<128x128xf32, #tpu.memory_space<vmem>>, vector<128x128xf32>
    tpu.vector_store %arg7[%c0_15, %c0_16], %19 {strides = array<i32>} : memref<128x128xf32, #tpu.memory_space<vmem>>, vector<128x128xf32>,
    return
  }
  func.func @transform_0(%arg0: i32) -> (i32, i32) {
    %c0_i32 = arith.constant 0 : i32
    %c0_i32_0 = arith.constant 0 : i32
    return %arg0, %c0_i32 : i32, i32
  }
  func.func @transform_1(%arg0: i32) -> (i32, i32) {
    %c0_i32 = arith.constant 0 : i32
    %c0_i32_0 = arith.constant 0 : i32
    %c0_i32_1 = arith.constant 0 : i32
    return %c0_i32, %c0_i32_0 : i32, i32
  }
  func.func @transform_2(%arg0: i32) -> (i32, i32) {
    %c0_i32 = arith.constant 0 : i32
    %c0_i32_0 = arith.constant 0 : i32
    %c0_i32_1 = arith.constant 0 : i32
    return %c0_i32, %c0_i32_0 : i32, i32
  }
  func.func @transform_3(%arg0: i32) -> (i32, i32) {
    %c0_i32 = arith.constant 0 : i32
    %c0_i32_0 = arith.constant 0 : i32
    %c0_i32_1 = arith.constant 0 : i32
    return %c0_i32, %c0_i32_0 : i32, i32
  }
  func.func @transform_4(%arg0: i32) -> (i32, i32) {
    %c0_i32 = arith.constant 0 : i32
    %c0_i32_0 = arith.constant 0 : i32
    %c0_i32_1 = arith.constant 0 : i32
    return %c0_i32, %c0_i32_0 : i32, i32
  }
  func.func @transform_5(%arg0: i32) -> (i32, i32) {
    %c0_i32 = arith.constant 0 : i32
    %c0_i32_0 = arith.constant 0 : i32
    %c0_i32_1 = arith.constant 0 : i32
    return %c0_i32, %c0_i32_0 : i32, i32
  }
  func.func @transform_6(%arg0: i32) -> (i32, i32) {
    %c0_i32 = arith.constant 0 : i32
    %c0_i32_0 = arith.constant 0 : i32
    return %arg0, %c0_i32 : i32, i32
  }
}

</mosaic_0001>

<llo_original>
// kernel: tpu_custom_call.1
$region0: #{tpu_custom_call.1}
  #allocation0 [shape = 'u32[]', space=smem, size = 0x4, offset = 0x4, fixed_abs, tag = 'smem constant byte address 0x4 - core index']
  #allocation1 [shape = 'u32[144,128]{1,0:T(1,128)}', space=vmem, size = 0x12000, scoped, tag = 'internal scratch']
  %s0 = inlined_call_operand.vmem [shape: f32[256,64], index: 0, kind: input, shape index: {}]
  %s1 = inlined_call_operand.vmem [shape: bf16[64,256], index: 1, kind: input, shape index: {}]
  %s2 = inlined_call_operand.vmem [shape: f32[1,256], index: 2, kind: input, shape index: {}]
  %s3 = inlined_call_operand.vmem [shape: bf16[256,128], index: 3, kind: input, shape index: {}]
  %s4 = inlined_call_operand.vmem [shape: f32[1,128], index: 4, kind: input, shape index: {}]
  %s5 = inlined_call_operand.vmem [shape: bf16[128,128], index: 5, kind: input, shape index: {}]
  %s6 = inlined_call_operand.hbm [shape: f32[256,128], index: 6, kind: output, shape index: {}]
  %s7 = sld [smem:[#allocation0]]
  $region57: #{tpu_custom_call.1} parent=0
    _
  %s9 = ssub.s32 1, %s7
  %s10 = scalar_select 0, %s9, %s7
  $region1: #{tpu_custom_call.1} parent=0
    #allocation2 [shape = 'u8[131072]{0}', space=vmem, size = 0x20000, scoped, tag = 'output window, operand 0']
    #allocation3 [shape = 's32[2]{0}', space=sflag, size = 0x8, scoped, tag = 'scoped memory for tpu_custom_call.1']
    %11 = vsyncpa [#allocation3], 0
    %s12 = scalar_lea.sflag [#allocation3], 1
    %13 = vsyncpa %s12, 0
    loop: start=0, step=1, limit=4
    $region2: #{tpu_custom_call.1} parent=1 // loop_pre_header
      _
    $region3: #{tpu_custom_call.1} parent=1 // loop_header
      %s15 = sphi 0, %s19
      %p16 = scmp.ge.s32.totalorder %s15, 4
      %s25 = sphi 0, %s27
      %s28 = sphi 0, %s25
      %s29 = sphi 0, %s28
      %s45 = sphi 0, %s29
      %s49 = sphi 0, %s49
      %s51 = sphi 0, %s49
      %s52 = sphi 0, %s51
      %s66 = sphi 0, %s52
      %s70 = sphi 0, %s70
      %s72 = sphi 0, %s70
      %s73 = sphi 0, %s72
      %s87 = sphi 0, %s73
      %s91 = sphi 0, %s91
      %s93 = sphi 0, %s91
      %s94 = sphi 0, %s93
      %s108 = sphi 0, %s94
      %s112 = sphi 0, %s112
      %s114 = sphi 0, %s112
      %s115 = sphi 0, %s114
      %s129 = sphi 0, %s115
      %s133 = sphi 0, %s133
      %s135 = sphi 0, %s133
      %s136 = sphi 0, %s135
      %s150 = sphi 0, %s136
      %s156 = sphi 0, %s158
      %s159 = sphi 0, %s156
      %s160 = sphi 0, %s159
      %s176 = sphi 0, %s160
    $region4: #{tpu_custom_call.1} parent=1 // loop_header_branch
      %18 = sbr.rel (%p16) target = $region8
    $region5: #{tpu_custom_call.1} parent=1 // loop_body
      %s20 = ssub.s32 %s15, 1
      %s21 = ssub.s32 %s15, 2
      %s22 = sadd.s32 %s15, 1
      %s23 = ssub.s32 %s15, %s22
      %p24 = scmp.eq.s32.totalorder %s23, 0
      %s26 = sadd.s32 %s25, 1
      %s27 = scalar_select %p24, %s25, %s26
      %p30 = pneg %p24
      %p31 = scmp.eq.s32.totalorder %s15, 1
      %p32 = por %p30, %p31
      %p33 = scmp.ne.s32.totalorder %s25, %s28
      %p34 = scmp.eq.s32.totalorder %s15, 0
      %p35 = por %p33, %p34
      %p36 = scmp.ne.s32.totalorder %s25, %s28
      %p37 = scmp.eq.s32.totalorder %s20, 1
      %p38 = por %p36, %p37
      %p39 = scmp.ne.s32.totalorder %s28, %s29
      %p40 = scmp.eq.s32.totalorder %s20, 0
      %p41 = por %p39, %p40
      %p42 = scmp.ne.s32.totalorder %s28, %s29
      %p43 = scmp.eq.s32.totalorder %s21, 1
      %p44 = por %p42, %p43
      %p46 = scmp.ne.s32.totalorder %s29, %s45
      %p47 = scmp.eq.s32.totalorder %s21, 0
      %p48 = por %p46, %p47
      %s50 = sadd.s32 %s49, 1
      %p53 = scmp.eq.s32.totalorder %s15, 1
      %p54 = scmp.ne.s32.totalorder %s49, %s51
      %p55 = scmp.eq.s32.totalorder %s15, 0
      %p56 = por %p54, %p55
      %p57 = scmp.ne.s32.totalorder %s49, %s51
      %p58 = scmp.eq.s32.totalorder %s20, 1
      %p59 = por %p57, %p58
      %p60 = scmp.ne.s32.totalorder %s51, %s52
      %p61 = scmp.eq.s32.totalorder %s20, 0
      %p62 = por %p60, %p61
      %p63 = scmp.ne.s32.totalorder %s51, %s52
      %p64 = scmp.eq.s32.totalorder %s21, 1
      %p65 = por %p63, %p64
      %p67 = scmp.ne.s32.totalorder %s52, %s66
      %p68 = scmp.eq.s32.totalorder %s21, 0
      %p69 = por %p67, %p68
      %s71 = sadd.s32 %s70, 1
      %p74 = scmp.eq.s32.totalorder %s15, 1
      %p75 = scmp.ne.s32.totalorder %s70, %s72
      %p76 = scmp.eq.s32.totalorder %s15, 0
      %p77 = por %p75, %p76
      %p78 = scmp.ne.s32.totalorder %s70, %s72
      %p79 = scmp.eq.s32.totalorder %s20, 1
      %p80 = por %p78, %p79
      %p81 = scmp.ne.s32.totalorder %s72, %s73
      %p82 = scmp.eq.s32.totalorder %s20, 0
      %p83 = por %p81, %p82
      %p84 = scmp.ne.s32.totalorder %s72, %s73
      %p85 = scmp.eq.s32.totalorder %s21, 1
      %p86 = por %p84, %p85
      %p88 = scmp.ne.s32.totalorder %s73, %s87
      %p89 = scmp.eq.s32.totalorder %s21, 0
      %p90 = por %p88, %p89
      %s92 = sadd.s32 %s91, 1
      %p95 = scmp.eq.s32.totalorder %s15, 1
      %p96 = scmp.ne.s32.totalorder %s91, %s93
      %p97 = scmp.eq.s32.totalorder %s15, 0
      %p98 = por %p96, %p97
      %p99 = scmp.ne.s32.totalorder %s91, %s93
      %p100 = scmp.eq.s32.totalorder %s20, 1
      %p101 = por %p99, %p100
      %p102 = scmp.ne.s32.totalorder %s93, %s94
      %p103 = scmp.eq.s32.totalorder %s20, 0
      %p104 = por %p102, %p103
      %p105 = scmp.ne.s32.totalorder %s93, %s94
      %p106 = scmp.eq.s32.totalorder %s21, 1
      %p107 = por %p105, %p106
      %p109 = scmp.ne.s32.totalorder %s94, %s108
      %p110 = scmp.eq.s32.totalorder %s21, 0
      %p111 = por %p109, %p110
      %s113 = sadd.s32 %s112, 1
      %p116 = scmp.eq.s32.totalorder %s15, 1
      %p117 = scmp.ne.s32.totalorder %s112, %s114
      %p118 = scmp.eq.s32.totalorder %s15, 0
      %p119 = por %p117, %p118
      %p120 = scmp.ne.s32.totalorder %s112, %s114
      %p121 = scmp.eq.s32.totalorder %s20, 1
      %p122 = por %p120, %p121
      %p123 = scmp.ne.s32.totalorder %s114, %s115
      %p124 = scmp.eq.s32.totalorder %s20, 0
      %p125 = por %p123, %p124
      %p126 = scmp.ne.s32.totalorder %s114, %s115
      %p127 = scmp.eq.s32.totalorder %s21, 1
      %p128 = por %p126, %p127
      %p130 = scmp.ne.s32.totalorder %s115, %s129
      %p131 = scmp.eq.s32.totalorder %s21, 0
      %p132 = por %p130, %p131
      %s134 = sadd.s32 %s133, 1
      %p137 = scmp.eq.s32.totalorder %s15, 1
      %p138 = scmp.ne.s32.totalorder %s133, %s135
      %p139 = scmp.eq.s32.totalorder %s15, 0
      %p140 = por %p138, %p139
      %p141 = scmp.ne.s32.totalorder %s133, %s135
      %p142 = scmp.eq.s32.totalorder %s20, 1
      %p143 = por %p141, %p142
      %p144 = scmp.ne.s32.totalorder %s135, %s136
      %p145 = scmp.eq.s32.totalorder %s20, 0
      %p146 = por %p144, %p145
      %p147 = scmp.ne.s32.totalorder %s135, %s136
      %p148 = scmp.eq.s32.totalorder %s21, 1
      %p149 = por %p147, %p148
      %p151 = scmp.ne.s32.totalorder %s136, %s150
      %p152 = scmp.eq.s32.totalorder %s21, 0
      %p153 = por %p151, %p152
      %s154 = ssub.s32 %s15, %s22
      %p155 = scmp.eq.s32.totalorder %s154, 0
      %s157 = sadd.s32 %s156, 1
      %s158 = scalar_select %p155, %s156, %s157
      %p161 = pneg %p155
      %p162 = scmp.eq.s32.totalorder %s15, 1
      %p163 = por %p161, %p162
      %p164 = scmp.ne.s32.totalorder %s156, %s159
      %p165 = scmp.eq.s32.totalorder %s15, 0
      %p166 = por %p164, %p165
      %p167 = scmp.ne.s32.totalorder %s156, %s159
      %p168 = scmp.eq.s32.totalorder %s20, 1
      %p169 = por %p167, %p168
      %p170 = scmp.ne.s32.totalorder %s159, %s160
      %p171 = scmp.eq.s32.totalorder %s20, 0
      %p172 = por %p170, %p171
      %p173 = scmp.ne.s32.totalorder %s159, %s160
      %p174 = scmp.eq.s32.totalorder %s21, 1
      %p175 = por %p173, %p174
      %p177 = scmp.ne.s32.totalorder %s160, %s176
      %p178 = scmp.eq.s32.totalorder %s21, 0
      %p179 = por %p177, %p178
      %p180 = scmp.le.s32.totalorder 1, %s15
      %p181 = scmp.lt.s32.totalorder %s15, 3
      %p182 = pnand %p180, %p181
      %p183 = pneg %p182
      // Predicated region
      $region9: #{tpu_custom_call.1} parent=5 // pred_check
        _
      $region10: #{tpu_custom_call.1} parent=5 // pred_check_branch
        %185 = sbr.rel (%p182) target = $region12
      $region11: #{tpu_custom_call.1} parent=5 // pred_region
        %s186 = ssub.s32 %s15, 1
        // Predicated region
        $region13: #{tpu_custom_call.1} parent=11 // pred_check
          %p187 = pneg %p62
        $region14: #{tpu_custom_call.1} parent=11 // pred_check_branch
          %189 = sbr.rel (%p187) target = $region16
        $region15: #{tpu_custom_call.1} parent=11 // pred_region
          _
        $region16: #{tpu_custom_call.1} parent=11 // pred_fallthru
          _
        // Predicated region
        $region17: #{tpu_custom_call.1} parent=11 // pred_check
          %p190 = pneg %p83
        $region18: #{tpu_custom_call.1} parent=11 // pred_check_branch
          %192 = sbr.rel (%p190) target = $region20
        $region19: #{tpu_custom_call.1} parent=11 // pred_region
          _
        $region20: #{tpu_custom_call.1} parent=11 // pred_fallthru
          _
        // Predicated region
        $region21: #{tpu_custom_call.1} parent=11 // pred_check
          %p193 = pneg %p104
        $region22: #{tpu_custom_call.1} parent=11 // pred_check_branch
          %195 = sbr.rel (%p193) target = $region24
        $region23: #{tpu_custom_call.1} parent=11 // pred_region
          _
        $region24: #{tpu_custom_call.1} parent=11 // pred_fallthru
          _
        // Predicated region
        $region25: #{tpu_custom_call.1} parent=11 // pred_check
          %p196 = pneg %p125
        $region26: #{tpu_custom_call.1} parent=11 // pred_check_branch
          %198 = sbr.rel (%p196) target = $region28
        $region27: #{tpu_custom_call.1} parent=11 // pred_region
          _
        $region28: #{tpu_custom_call.1} parent=11 // pred_fallthru
          _
        // Predicated region
        $region29: #{tpu_custom_call.1} parent=11 // pred_check
          %p199 = pneg %p146
        $region30: #{tpu_custom_call.1} parent=11 // pred_check_branch
          %201 = sbr.rel (%p199) target = $region32
        $region31: #{tpu_custom_call.1} parent=11 // pred_region
          _
        $region32: #{tpu_custom_call.1} parent=11 // pred_fallthru
          _
      $region12: #{tpu_custom_call.1} parent=5 // pred_fallthru
        _
      %p202 = scmp.lt.s32.totalorder %s15, 2
      // Predicated region
      $region33: #{tpu_custom_call.1} parent=5 // pred_check
        %p203 = pneg %p202
      $region34: #{tpu_custom_call.1} parent=5 // pred_check_branch
        %205 = sbr.rel (%p203) target = $region36
      $region35: #{tpu_custom_call.1} parent=5 // pred_region
        // Predicated region
        $region37: #{tpu_custom_call.1} parent=35 // pred_check
          %p206 = pneg %p35
        $region38: #{tpu_custom_call.1} parent=35 // pred_check_branch
          %208 = sbr.rel (%p206) target = $region40
        $region39: #{tpu_custom_call.1} parent=35 // pred_region
          %s209 = smul.u32 16, %s15
          %p210 = scmp.lt.s32.totalorder %s209, 31
          %s211 = scalar_select %p210, %s209, 31
          %s212 = smul.addr %s211, 8
          %s213 = scalar_lea.vmem %s0, %s212
          %s214 = smul.u32 16, %s15
        $region40: #{tpu_custom_call.1} parent=35 // pred_fallthru
          _
      $region36: #{tpu_custom_call.1} parent=5 // pred_fallthru
        _
      %p215 = scmp.le.s32.totalorder 1, %s15
      %p216 = scmp.lt.s32.totalorder %s15, 3
      %p217 = pnand %p215, %p216
      %p218 = pneg %p217
      // Predicated region
      $region41: #{tpu_custom_call.1} parent=5 // pred_check
        _
      $region42: #{tpu_custom_call.1} parent=5 // pred_check_branch
        %220 = sbr.rel (%p217) target = $region44
      $region43: #{tpu_custom_call.1} parent=5 // pred_region
        %s221 = ssub.s32 %s15, 1
        %s222 = smul.u32 16, %s20
        %p223 = scmp.lt.s32.totalorder %s222, 31
        %s224 = scalar_select %p223, %s222, 31
        %s225 = smul.addr %s224, 8
        %s226 = scalar_lea.vmem %s0, %s225
        %p227 = pneg %p41
        %p228 = pneg %p38
        %p229 = pneg %p62
        %p230 = pneg %p59
        %p231 = pneg %p83
        %p232 = pneg %p80
        %p233 = pneg %p104
        %p234 = pneg %p101
        %p235 = pneg %p125
        %p236 = pneg %p122
        %p237 = pneg %p146
        %p238 = pneg %p143
        %p239 = pneg %p172
        %p240 = pneg %p169
        %s241 = sand.u32 %s159, 1
        %s242 = scalar_lea.sflag [#allocation3], %s241
        %s243 = sand.u32 %s159, 1
        %s244 = smul.addr %s243, 128
        %s245 = scalar_lea.vmem [#allocation2], %s244
        %s246 = smul.u32 16, %s20
        %p247 = scmp.lt.s32.totalorder %s246, 31
        %s248 = scalar_select %p247, %s246, 31
        %s249 = smul.addr %s248, 8
        %s250 = scalar_lea.vmem %s0, %s249
        %s251 = smul.u32 16, %s20
        %s252 = smul.u32 16, %s20
        %v254 = vld [vmem:[%s250] sm:$0xff]
        %v255 = vld [vmem:[%s250 + $0x8] sm:$0xff]
        %v256 = vld [vmem:[%s250 + $0x10] sm:$0xff]
        %v257 = vld [vmem:[%s250 + $0x18] sm:$0xff]
        %v258 = vld [vmem:[%s250 + $0x20] sm:$0xff]
        %v259 = vld [vmem:[%s250 + $0x28] sm:$0xff]
        %v260 = vld [vmem:[%s250 + $0x30] sm:$0xff]
        %v261 = vld [vmem:[%s250 + $0x38] sm:$0xff]
        %v262 = vld [vmem:[%s250 + $0x40] sm:$0xff]
        %v263 = vld [vmem:[%s250 + $0x48] sm:$0xff]
        %v264 = vld [vmem:[%s250 + $0x50] sm:$0xff]
        %v265 = vld [vmem:[%s250 + $0x58] sm:$0xff]
        %v266 = vld [vmem:[%s250 + $0x60] sm:$0xff]
        %v267 = vld [vmem:[%s250 + $0x68] sm:$0xff]
        %v268 = vld [vmem:[%s250 + $0x70] sm:$0xff]
        %v269 = vld [vmem:[%s250 + $0x78] sm:$0xff]
        %v270 = vpack.c.bf16 %v255, %v254
        %v271 = vpack.c.bf16 %v257, %v256
        %v272 = vpack.c.bf16 %v259, %v258
        %v273 = vpack.c.bf16 %v261, %v260
        %v274 = vpack.c.bf16 %v263, %v262
        %v275 = vpack.c.bf16 %v265, %v264
        %v276 = vpack.c.bf16 %v267, %v266
        %v277 = vpack.c.bf16 %v269, %v268
        %v278 = vld [vmem:[%s1] sm:$0xff]
        %v279 = vld [vmem:[%s1 + $0x8] sm:$0xff]
        %v280 = vld [vmem:[%s1 + $0x10] sm:$0xff]
        %v281 = vld [vmem:[%s1 + $0x18] sm:$0xff]
        %v282 = vld [vmem:[%s1 + $0x20] sm:$0xff]
        %v283 = vld [vmem:[%s1 + $0x28] sm:$0xff]
        %v284 = vld [vmem:[%s1 + $0x30] sm:$0xff]
        %v285 = vld [vmem:[%s1 + $0x38] sm:$0xff]
        %v286 = vld [vmem:[%s2] sm:$0x3]
        %v288 = vlaneseq
        %v289 = vshrl.u32 %v288, 7
        %v290 = vsub.s32 0, %v289
        %v291 = vrot.slane %v286, %v290
        %v292 = vlaneseq
        %v293 = vshrl.u32 %v292, 7
        %v294 = vsub.s32 1, %v293
        %v295 = vrot.slane %v286, %v294
        %v306 = vunpack.c.l.b16 %v278
        %v307 = vunpack.c.h.b16 %v278
        %v308 = vunpack.c.l.b16 %v279
        %v309 = vunpack.c.h.b16 %v279
        %v310 = vunpack.c.l.b16 %v280
        %v311 = vunpack.c.h.b16 %v280
        %v312 = vunpack.c.l.b16 %v281
        %v313 = vunpack.c.h.b16 %v281
        %v314 = vunpack.c.l.b16 %v282
        %v315 = vunpack.c.h.b16 %v282
        %v316 = vunpack.c.l.b16 %v283
        %v317 = vunpack.c.h.b16 %v283
        %v318 = vunpack.c.l.b16 %v284
        %v319 = vunpack.c.h.b16 %v284
        %v320 = vunpack.c.l.b16 %v285
        %v321 = vunpack.c.h.b16 %v285
        %v322 = vpack.c.b16 %v308, %v306
        %v323 = vpack.c.b16 %v309, %v307
        %v324 = vpack.c.b16 %v312, %v310
        %v325 = vpack.c.b16 %v313, %v311
        %v326 = vpack.c.b16 %v316, %v314
        %v327 = vpack.c.b16 %v317, %v315
        %v328 = vpack.c.b16 %v320, %v318
        %v329 = vpack.c.b16 %v321, %v319
        %vm338 = vcmask 523264
        %v340 = vsel %vm338, %v270, 0
        %v343 = vsel %vm338, %v271, 0
        %v346 = vsel %vm338, %v272, 0
        %v349 = vsel %vm338, %v273, 0
        %v352 = vsel %vm338, %v274, 0
        %v355 = vsel %vm338, %v275, 0
        %v358 = vsel %vm338, %v276, 0
        %v361 = vsel %vm338, %v277, 0
        %363 = vmatprep.subr.bf16.mxu0 %v323
        %364 = vmatpush1.bf16.msra.mxu0 %v322
        %365 = vmatprep.subr.bf16.mxu0 %v325
        %366 = vmatpush1.bf16.msra.mxu0 %v324
        %367 = vmatprep.subr.bf16.mxu0 %v327
        %368 = vmatpush1.bf16.msra.mxu0 %v326
        %369 = vmatprep.subr.bf16.mxu0 %v329
        %370 = vmatpush1.bf16.msra.mxu0 %v328
        %371 = vmatprep.subr.bf16.mxu0 0
        %372 = vmatpush1.bf16.msra.mxu0 0
        %373 = vmatprep.subr.bf16.mxu0 0
        %374 = vmatpush1.bf16.msra.mxu0 0
        %375 = vmatprep.subr.bf16.mxu0 0
        %376 = vmatpush1.bf16.msra.mxu0 0
        %377 = vmatprep.subr.bf16.mxu0 0
        %378 = vmatpush1.bf16.msra.mxu0 0
        %379 = vmatprep.subr.bf16.mxu0 0
        %380 = vmatpush1.bf16.msra.mxu0 0
        %381 = vmatprep.subr.bf16.mxu0 0
        %382 = vmatpush1.bf16.msra.mxu0 0
        %383 = vmatprep.subr.bf16.mxu0 0
        %384 = vmatpush1.bf16.msra.mxu0 0
        %385 = vmatprep.subr.bf16.mxu0 0
        %386 = vmatpush1.bf16.msra.mxu0 0
        %387 = vmatprep.subr.bf16.mxu0 0
        %388 = vmatpush1.bf16.msra.mxu0 0
        %389 = vmatprep.subr.bf16.mxu0 0
        %390 = vmatpush1.bf16.msra.mxu0 0
        %391 = vmatprep.subr.bf16.mxu0 0
        %392 = vmatpush1.bf16.msra.mxu0 0
        %393 = vmatprep.subr.bf16.mxu0 0
        %394 = vmatpush1.bf16.msra.mxu0 0
        %395 = vmatprep.mubr.bf16.mxu0 0
        %396 = vmatmul.mubr.bf16.gmra.mrb[0].mxu0 %v340
        %v397 = vpop.f32.mrb[0].mxu0
        %v398 = vadd.f32 %v291, %v397
        %v399 = vpop.f32.mrb[0].mxu0
        %v400 = vadd.f32 %v295, %v399
        %v401 = vpop.f32.mrb[0].mxu0
        %v402 = vadd.f32 %v291, %v401
        %v403 = vpop.f32.mrb[0].mxu0
        %v404 = vadd.f32 %v295, %v403
        %405 = vmatprep.mubr.bf16.mxu0 0
        %406 = vmatmul.mubr.bf16.gmra.mrb[0].mxu0 %v343
        %v407 = vpop.f32.mrb[0].mxu0
        %v408 = vadd.f32 %v291, %v407
        %v409 = vpop.f32.mrb[0].mxu0
        %v410 = vadd.f32 %v295, %v409
        %v411 = vpop.f32.mrb[0].mxu0
        %v412 = vadd.f32 %v291, %v411
        %v413 = vpop.f32.mrb[0].mxu0
        %v414 = vadd.f32 %v295, %v413
        %415 = vmatprep.mubr.bf16.mxu0 0
        %416 = vmatmul.mubr.bf16.gmra.mrb[0].mxu0 %v346
        %v417 = vpop.f32.mrb[0].mxu0
        %v418 = vadd.f32 %v291, %v417
        %v419 = vpop.f32.mrb[0].mxu0
        %v420 = vadd.f32 %v295, %v419
        %v421 = vpop.f32.mrb[0].mxu0
        %v422 = vadd.f32 %v291, %v421
        %v423 = vpop.f32.mrb[0].mxu0
        %v424 = vadd.f32 %v295, %v423
        %425 = vmatprep.mubr.bf16.mxu0 0
        %426 = vmatmul.mubr.bf16.gmra.mrb[0].mxu0 %v349
        %v427 = vpop.f32.mrb[0].mxu0
        %v428 = vadd.f32 %v291, %v427
        %v429 = vpop.f32.mrb[0].mxu0
        %v430 = vadd.f32 %v295, %v429
        %v431 = vpop.f32.mrb[0].mxu0
        %v432 = vadd.f32 %v291, %v431
        %v433 = vpop.f32.mrb[0].mxu0
        %v434 = vadd.f32 %v295, %v433
        %435 = vmatprep.mubr.bf16.mxu0 0
        %436 = vmatmul.mubr.bf16.gmra.mrb[0].mxu0 %v352
        %v437 = vpop.f32.mrb[0].mxu0
        %v438 = vadd.f32 %v291, %v437
        %v439 = vpop.f32.mrb[0].mxu0
        %v440 = vadd.f32 %v295, %v439
        %v441 = vpop.f32.mrb[0].mxu0
        %v442 = vadd.f32 %v291, %v441
        %v443 = vpop.f32.mrb[0].mxu0
        %v444 = vadd.f32 %v295, %v443
        %445 = vmatprep.mubr.bf16.mxu0 0
        %446 = vmatmul.mubr.bf16.gmra.mrb[0].mxu0 %v355
        %v447 = vpop.f32.mrb[0].mxu0
        %v448 = vadd.f32 %v291, %v447
        %v449 = vpop.f32.mrb[0].mxu0
        %v450 = vadd.f32 %v295, %v449
        %v451 = vpop.f32.mrb[0].mxu0
        %v452 = vadd.f32 %v291, %v451
        %v453 = vpop.f32.mrb[0].mxu0
        %v454 = vadd.f32 %v295, %v453
        %455 = vmatprep.mubr.bf16.mxu0 0
        %456 = vmatmul.mubr.bf16.gmra.mrb[0].mxu0 %v358
        %v457 = vpop.f32.mrb[0].mxu0
        %v458 = vadd.f32 %v291, %v457
        %v459 = vpop.f32.mrb[0].mxu0
        %v460 = vadd.f32 %v295, %v459
        %v461 = vpop.f32.mrb[0].mxu0
        %v462 = vadd.f32 %v291, %v461
        %v463 = vpop.f32.mrb[0].mxu0
        %v464 = vadd.f32 %v295, %v463
        %465 = vmatprep.mubr.bf16.mxu0 0
        %466 = vmatmul.mubr.bf16.gmra.mrb[0].mxu0 %v361
        %v467 = vpop.f32.mrb[0].mxu0
        %v468 = vadd.f32 %v291, %v467
        %v469 = vpop.f32.mrb[0].mxu0
        %v470 = vadd.f32 %v295, %v469
        %v471 = vpop.f32.mrb[0].mxu0
        %v472 = vadd.f32 %v291, %v471
        %v473 = vpop.f32.mrb[0].mxu0
        %v474 = vadd.f32 %v295, %v473
        %475 = vdwg.mxu0
        %v476 = vmax.f32 %v398, 0.0
        %v477 = vmax.f32 %v400, 0.0
        %v478 = vmax.f32 %v402, 0.0
        %v479 = vmax.f32 %v404, 0.0
        %v480 = vmax.f32 %v408, 0.0
        %v481 = vmax.f32 %v410, 0.0
        %v482 = vmax.f32 %v412, 0.0
        %v483 = vmax.f32 %v414, 0.0
        %v484 = vmax.f32 %v418, 0.0
        %v485 = vmax.f32 %v420, 0.0
        %v486 = vmax.f32 %v422, 0.0
        %v487 = vmax.f32 %v424, 0.0
        %v488 = vmax.f32 %v428, 0.0
        %v489 = vmax.f32 %v430, 0.0
        %v490 = vmax.f32 %v432, 0.0
        %v491 = vmax.f32 %v434, 0.0
        %v492 = vmax.f32 %v438, 0.0
        %v493 = vmax.f32 %v440, 0.0
        %v494 = vmax.f32 %v442, 0.0
        %v495 = vmax.f32 %v444, 0.0
        %v496 = vmax.f32 %v448, 0.0
        %v497 = vmax.f32 %v450, 0.0
        %v498 = vmax.f32 %v452, 0.0
        %v499 = vmax.f32 %v454, 0.0
        %v500 = vmax.f32 %v458, 0.0
        %v501 = vmax.f32 %v460, 0.0
        %v502 = vmax.f32 %v462, 0.0
        %v503 = vmax.f32 %v464, 0.0
        %v504 = vmax.f32 %v468, 0.0
        %v505 = vmax.f32 %v470, 0.0
        %v506 = vmax.f32 %v472, 0.0
        %v507 = vmax.f32 %v474, 0.0
        %v508 = vpack.c.bf16 %v478, %v476
        %v509 = vpack.c.bf16 %v479, %v477
        %v510 = vpack.c.bf16 %v482, %v480
        %v511 = vpack.c.bf16 %v483, %v481
        %v512 = vpack.c.bf16 %v486, %v484
        %v513 = vpack.c.bf16 %v487, %v485
        %v514 = vpack.c.bf16 %v490, %v488
        %v515 = vpack.c.bf16 %v491, %v489
        %v516 = vpack.c.bf16 %v494, %v492
        %v517 = vpack.c.bf16 %v495, %v493
        %v518 = vpack.c.bf16 %v498, %v496
        %v519 = vpack.c.bf16 %v499, %v497
        %v520 = vpack.c.bf16 %v502, %v500
        %v521 = vpack.c.bf16 %v503, %v501
        %v522 = vpack.c.bf16 %v506, %v504
        %v523 = vpack.c.bf16 %v507, %v505
        %v524 = vld [vmem:[%s3] sm:$0xf]
        %v525 = vld [vmem:[%s3 + $0x4] sm:$0xf]
        %v526 = vld [vmem:[%s3 + $0x8] sm:$0xf]
        %v527 = vld [vmem:[%s3 + $0xc] sm:$0xf]
        %v528 = vld [vmem:[%s3 + $0x10] sm:$0xf]
        %v529 = vld [vmem:[%s3 + $0x14] sm:$0xf]
        %v530 = vld [vmem:[%s3 + $0x18] sm:$0xf]
        %v531 = vld [vmem:[%s3 + $0x1c] sm:$0xf]
        %v532 = vld [vmem:[%s3 + $0x20] sm:$0xf]
        %v533 = vld [vmem:[%s3 + $0x24] sm:$0xf]
        %v534 = vld [vmem:[%s3 + $0x28] sm:$0xf]
        %v535 = vld [vmem:[%s3 + $0x2c] sm:$0xf]
        %v536 = vld [vmem:[%s3 + $0x30] sm:$0xf]
        %v537 = vld [vmem:[%s3 + $0x34] sm:$0xf]
        %v538 = vld [vmem:[%s3 + $0x38] sm:$0xf]
        %v539 = vld [vmem:[%s3 + $0x3c] sm:$0xf]
        %v540 = vld [vmem:[%s3 + $0x40] sm:$0xf]
        %v541 = vld [vmem:[%s3 + $0x44] sm:$0xf]
        %v542 = vld [vmem:[%s3 + $0x48] sm:$0xf]
        %v543 = vld [vmem:[%s3 + $0x4c] sm:$0xf]
        %v544 = vld [vmem:[%s3 + $0x50] sm:$0xf]
        %v545 = vld [vmem:[%s3 + $0x54] sm:$0xf]
        %v546 = vld [vmem:[%s3 + $0x58] sm:$0xf]
        %v547 = vld [vmem:[%s3 + $0x5c] sm:$0xf]
        %v548 = vld [vmem:[%s3 + $0x60] sm:$0xf]
        %v549 = vld [vmem:[%s3 + $0x64] sm:$0xf]
        %v550 = vld [vmem:[%s3 + $0x68] sm:$0xf]
        %v551 = vld [vmem:[%s3 + $0x6c] sm:$0xf]
        %v552 = vld [vmem:[%s3 + $0x70] sm:$0xf]
        %v553 = vld [vmem:[%s3 + $0x74] sm:$0xf]
        %v554 = vld [vmem:[%s3 + $0x78] sm:$0xf]
        %v555 = vld [vmem:[%s3 + $0x7c] sm:$0xf]
        %v556 = vld [vmem:[%s4] sm:$0x1]
        %v558 = vlaneseq
        %v559 = vshrl.u32 %v558, 7
        %v560 = vsub.s32 0, %v559
        %v561 = vrot.slane %v556, %v560
        %v595 = vunpack.c.l.b16 %v524
        %v596 = vunpack.c.l.b16 %v525
        %v597 = vunpack.c.l.b16 %v526
        %v598 = vunpack.c.l.b16 %v527
        %v599 = vunpack.c.l.b16 %v528
        %v600 = vunpack.c.l.b16 %v529
        %v601 = vunpack.c.l.b16 %v530
        %v602 = vunpack.c.l.b16 %v531
        %v603 = vunpack.c.l.b16 %v532
        %v604 = vunpack.c.l.b16 %v533
        %v605 = vunpack.c.l.b16 %v534
        %v606 = vunpack.c.l.b16 %v535
        %v607 = vunpack.c.l.b16 %v536
        %v608 = vunpack.c.l.b16 %v537
        %v609 = vunpack.c.l.b16 %v538
        %v610 = vunpack.c.l.b16 %v539
        %v611 = vunpack.c.l.b16 %v540
        %v612 = vunpack.c.l.b16 %v541
        %v613 = vunpack.c.l.b16 %v542
        %v614 = vunpack.c.l.b16 %v543
        %v615 = vunpack.c.l.b16 %v544
        %v616 = vunpack.c.l.b16 %v545
        %v617 = vunpack.c.l.b16 %v546
        %v618 = vunpack.c.l.b16 %v547
        %v619 = vunpack.c.l.b16 %v548
        %v620 = vunpack.c.l.b16 %v549
        %v621 = vunpack.c.l.b16 %v550
        %v622 = vunpack.c.l.b16 %v551
        %v623 = vunpack.c.l.b16 %v552
        %v624 = vunpack.c.l.b16 %v553
        %v625 = vunpack.c.l.b16 %v554
        %v626 = vunpack.c.l.b16 %v555
        %v627 = vpack.c.b16 %v596, %v595
        %v628 = vpack.c.b16 %v598, %v597
        %v629 = vpack.c.b16 %v600, %v599
        %v630 = vpack.c.b16 %v602, %v601
        %v631 = vpack.c.b16 %v604, %v603
        %v632 = vpack.c.b16 %v606, %v605
        %v633 = vpack.c.b16 %v608, %v607
        %v634 = vpack.c.b16 %v610, %v609
        %v635 = vpack.c.b16 %v612, %v611
        %v636 = vpack.c.b16 %v614, %v613
        %v637 = vpack.c.b16 %v616, %v615
        %v638 = vpack.c.b16 %v618, %v617
        %v639 = vpack.c.b16 %v620, %v619
        %v640 = vpack.c.b16 %v622, %v621
        %v641 = vpack.c.b16 %v624, %v623
        %v642 = vpack.c.b16 %v626, %v625
        %659 = vmatprep.subr.bf16.mxu0 0
        %660 = vmatpush1.bf16.msra.mxu0 %v627
        %661 = vmatprep.subr.bf16.mxu0 0
        %662 = vmatpush1.bf16.msra.mxu0 %v628
        %663 = vmatprep.subr.bf16.mxu0 0
        %664 = vmatpush1.bf16.msra.mxu0 %v629
        %665 = vmatprep.subr.bf16.mxu0 0
        %666 = vmatpush1.bf16.msra.mxu0 %v630
        %667 = vmatprep.subr.bf16.mxu0 0
        %668 = vmatpush1.bf16.msra.mxu0 %v631
        %669 = vmatprep.subr.bf16.mxu0 0
        %670 = vmatpush1.bf16.msra.mxu0 %v632
        %671 = vmatprep.subr.bf16.mxu0 0
        %672 = vmatpush1.bf16.msra.mxu0 %v633
        %673 = vmatprep.subr.bf16.mxu0 0
        %674 = vmatpush1.bf16.msra.mxu0 %v634
        %675 = vmatprep.subr.bf16.mxu0 0
        %676 = vmatpush1.bf16.msra.mxu0 %v635
        %677 = vmatprep.subr.bf16.mxu0 0
        %678 = vmatpush1.bf16.msra.mxu0 %v636
        %679 = vmatprep.subr.bf16.mxu0 0
        %680 = vmatpush1.bf16.msra.mxu0 %v637
        %681 = vmatprep.subr.bf16.mxu0 0
        %682 = vmatpush1.bf16.msra.mxu0 %v638
        %683 = vmatprep.subr.bf16.mxu0 0
        %684 = vmatpush1.bf16.msra.mxu0 %v639
        %685 = vmatprep.subr.bf16.mxu0 0
        %686 = vmatpush1.bf16.msra.mxu0 %v640
        %687 = vmatprep.subr.bf16.mxu0 0
        %688 = vmatpush1.bf16.msra.mxu0 %v641
        %689 = vmatprep.subr.bf16.mxu0 0
        %690 = vmatpush1.bf16.msra.mxu0 %v642
        %691 = vmatprep.mubr.bf16.mxu0 %v509
        %692 = vmatmul.mubr.bf16.gmra.mrb[0].mxu0 %v508
        %v693 = vpop.f32.mrb[0].mxu0
        %v694 = vadd.f32 %v561, %v693
        %v695 = vpop.f32.mrb[0].mxu0
        %v696 = vpop.f32.mrb[0].mxu0
        %v697 = vadd.f32 %v561, %v696
        %v698 = vpop.f32.mrb[0].mxu0
        %699 = vmatprep.mubr.bf16.mxu0 %v511
        %700 = vmatmul.mubr.bf16.gmra.mrb[0].mxu0 %v510
        %v701 = vpop.f32.mrb[0].mxu0
        %v702 = vadd.f32 %v561, %v701
        %v703 = vpop.f32.mrb[0].mxu0
        %v704 = vpop.f32.mrb[0].mxu0
        %v705 = vadd.f32 %v561, %v704
        %v706 = vpop.f32.mrb[0].mxu0
        %707 = vmatprep.mubr.bf16.mxu0 %v513
        %708 = vmatmul.mubr.bf16.gmra.mrb[0].mxu0 %v512
        %v709 = vpop.f32.mrb[0].mxu0
        %v710 = vadd.f32 %v561, %v709
        %v711 = vpop.f32.mrb[0].mxu0
        %v712 = vpop.f32.mrb[0].mxu0
        %v713 = vadd.f32 %v561, %v712
        %v714 = vpop.f32.mrb[0].mxu0
        %715 = vmatprep.mubr.bf16.mxu0 %v515
        %716 = vmatmul.mubr.bf16.gmra.mrb[0].mxu0 %v514
        %v717 = vpop.f32.mrb[0].mxu0
        %v718 = vadd.f32 %v561, %v717
        %v719 = vpop.f32.mrb[0].mxu0
        %v720 = vpop.f32.mrb[0].mxu0
        %v721 = vadd.f32 %v561, %v720
        %v722 = vpop.f32.mrb[0].mxu0
        %723 = vmatprep.mubr.bf16.mxu0 %v517
        %724 = vmatmul.mubr.bf16.gmra.mrb[0].mxu0 %v516
        %v725 = vpop.f32.mrb[0].mxu0
        %v726 = vadd.f32 %v561, %v725
        %v727 = vpop.f32.mrb[0].mxu0
        %v728 = vpop.f32.mrb[0].mxu0
        %v729 = vadd.f32 %v561, %v728
        %v730 = vpop.f32.mrb[0].mxu0
        %731 = vmatprep.mubr.bf16.mxu0 %v519
        %732 = vmatmul.mubr.bf16.gmra.mrb[0].mxu0 %v518
        %v733 = vpop.f32.mrb[0].mxu0
        %v734 = vadd.f32 %v561, %v733
        %v735 = vpop.f32.mrb[0].mxu0
        %v736 = vpop.f32.mrb[0].mxu0
        %v737 = vadd.f32 %v561, %v736
        %v738 = vpop.f32.mrb[0].mxu0
        %739 = vmatprep.mubr.bf16.mxu0 %v521
        %740 = vmatmul.mubr.bf16.gmra.mrb[0].mxu0 %v520
        %v741 = vpop.f32.mrb[0].mxu0
        %v742 = vadd.f32 %v561, %v741
        %v743 = vpop.f32.mrb[0].mxu0
        %v744 = vpop.f32.mrb[0].mxu0
        %v745 = vadd.f32 %v561, %v744
        %v746 = vpop.f32.mrb[0].mxu0
        %747 = vmatprep.mubr.bf16.mxu0 %v523
        %748 = vmatmul.mubr.bf16.gmra.mrb[0].mxu0 %v522
        %v749 = vpop.f32.mrb[0].mxu0
        %v750 = vadd.f32 %v561, %v749
        %v751 = vpop.f32.mrb[0].mxu0
        %v752 = vpop.f32.mrb[0].mxu0
        %v753 = vadd.f32 %v561, %v752
        %v754 = vpop.f32.mrb[0].mxu0
        %755 = vdwg.mxu0
        %v756 = vmax.f32 %v694, 0.0
        %v757 = vmax.f32 %v697, 0.0
        %v758 = vmax.f32 %v702, 0.0
        %v759 = vmax.f32 %v705, 0.0
        %v760 = vmax.f32 %v710, 0.0
        %v761 = vmax.f32 %v713, 0.0
        %v762 = vmax.f32 %v718, 0.0
        %v763 = vmax.f32 %v721, 0.0
        %v764 = vmax.f32 %v726, 0.0
        %v765 = vmax.f32 %v729, 0.0
        %v766 = vmax.f32 %v734, 0.0
        %v767 = vmax.f32 %v737, 0.0
        %v768 = vmax.f32 %v742, 0.0
        %v769 = vmax.f32 %v745, 0.0
        %v770 = vmax.f32 %v750, 0.0
        %v771 = vmax.f32 %v753, 0.0
        %v772 = vpack.c.bf16 %v757, %v756
        %v773 = vpack.c.bf16 %v759, %v758
        %v774 = vpack.c.bf16 %v761, %v760
        %v775 = vpack.c.bf16 %v763, %v762
        %v776 = vpack.c.bf16 %v765, %v764
        %v777 = vpack.c.bf16 %v767, %v766
        %v778 = vpack.c.bf16 %v769, %v768
        %v779 = vpack.c.bf16 %v771, %v770
        %v780 = vld [vmem:[%s5] sm:$0xf]
        %v781 = vld [vmem:[%s5 + $0x4] sm:$0xf]
        %v782 = vld [vmem:[%s5 + $0x8] sm:$0xf]
        %v783 = vld [vmem:[%s5 + $0xc] sm:$0xf]
        %v784 = vld [vmem:[%s5 + $0x10] sm:$0xf]
        %v785 = vld [vmem:[%s5 + $0x14] sm:$0xf]
        %v786 = vld [vmem:[%s5 + $0x18] sm:$0xf]
        %v787 = vld [vmem:[%s5 + $0x1c] sm:$0xf]
        %v788 = vld [vmem:[%s5 + $0x20] sm:$0xf]
        %v789 = vld [vmem:[%s5 + $0x24] sm:$0xf]
        %v790 = vld [vmem:[%s5 + $0x28] sm:$0xf]
        %v791 = vld [vmem:[%s5 + $0x2c] sm:$0xf]
        %v792 = vld [vmem:[%s5 + $0x30] sm:$0xf]
        %v793 = vld [vmem:[%s5 + $0x34] sm:$0xf]
        %v794 = vld [vmem:[%s5 + $0x38] sm:$0xf]
        %v795 = vld [vmem:[%s5 + $0x3c] sm:$0xf]
        %v812 = vunpack.c.l.b16 %v780
        %v813 = vunpack.c.l.b16 %v781
        %v814 = vunpack.c.l.b16 %v782
        %v815 = vunpack.c.l.b16 %v783
        %v816 = vunpack.c.l.b16 %v784
        %v817 = vunpack.c.l.b16 %v785
        %v818 = vunpack.c.l.b16 %v786
        %v819 = vunpack.c.l.b16 %v787
        %v820 = vunpack.c.l.b16 %v788
        %v821 = vunpack.c.l.b16 %v789
        %v822 = vunpack.c.l.b16 %v790
        %v823 = vunpack.c.l.b16 %v791
        %v824 = vunpack.c.l.b16 %v792
        %v825 = vunpack.c.l.b16 %v793
        %v826 = vunpack.c.l.b16 %v794
        %v827 = vunpack.c.l.b16 %v795
        %v828 = vpack.c.b16 %v813, %v812
        %v829 = vpack.c.b16 %v815, %v814
        %v830 = vpack.c.b16 %v817, %v816
        %v831 = vpack.c.b16 %v819, %v818
        %v832 = vpack.c.b16 %v821, %v820
        %v833 = vpack.c.b16 %v823, %v822
        %v834 = vpack.c.b16 %v825, %v824
        %v835 = vpack.c.b16 %v827, %v826
        %844 = vmatprep.subr.bf16.mxu0 0
        %845 = vmatpush1.bf16.msra.mxu0 %v828
        %846 = vmatprep.subr.bf16.mxu0 0
        %847 = vmatpush1.bf16.msra.mxu0 %v829
        %848 = vmatprep.subr.bf16.mxu0 0
        %849 = vmatpush1.bf16.msra.mxu0 %v830
        %850 = vmatprep.subr.bf16.mxu0 0
        %851 = vmatpush1.bf16.msra.mxu0 %v831
        %852 = vmatprep.subr.bf16.mxu0 0
        %853 = vmatpush1.bf16.msra.mxu0 %v832
        %854 = vmatprep.subr.bf16.mxu0 0
        %855 = vmatpush1.bf16.msra.mxu0 %v833
        %856 = vmatprep.subr.bf16.mxu0 0
        %857 = vmatpush1.bf16.msra.mxu0 %v834
        %858 = vmatprep.subr.bf16.mxu0 0
        %859 = vmatpush1.bf16.msra.mxu0 %v835
        %860 = vmatprep.subr.bf16.mxu0 0
        %861 = vmatpush1.bf16.msra.mxu0 0
        %862 = vmatprep.subr.bf16.mxu0 0
        %863 = vmatpush1.bf16.msra.mxu0 0
        %864 = vmatprep.subr.bf16.mxu0 0
        %865 = vmatpush1.bf16.msra.mxu0 0
        %866 = vmatprep.subr.bf16.mxu0 0
        %867 = vmatpush1.bf16.msra.mxu0 0
        %868 = vmatprep.subr.bf16.mxu0 0
        %869 = vmatpush1.bf16.msra.mxu0 0
        %870 = vmatprep.subr.bf16.mxu0 0
        %871 = vmatpush1.bf16.msra.mxu0 0
        %872 = vmatprep.subr.bf16.mxu0 0
        %873 = vmatpush1.bf16.msra.mxu0 0
        %874 = vmatprep.subr.bf16.mxu0 0
        %875 = vmatpush1.bf16.msra.mxu0 0
        %876 = vmatprep.mubr.bf16.mxu0 0
        %877 = vmatmul.mubr.bf16.gmra.mrb[0].mxu0 %v772
        %v878 = vpop.f32.mrb[0].mxu0
        %v879 = vadd.f32 0.0, %v878
        %v880 = vpop.f32.mrb[0].mxu0
        %v881 = vpop.f32.mrb[0].mxu0
        %v882 = vadd.f32 0.0, %v881
        %v883 = vpop.f32.mrb[0].mxu0
        %884 = vmatprep.mubr.bf16.mxu0 0
        %885 = vmatmul.mubr.bf16.gmra.mrb[0].mxu0 %v773
        %v886 = vpop.f32.mrb[0].mxu0
        %v887 = vadd.f32 0.0, %v886
        %v888 = vpop.f32.mrb[0].mxu0
        %v889 = vpop.f32.mrb[0].mxu0
        %v890 = vadd.f32 0.0, %v889
        %v891 = vpop.f32.mrb[0].mxu0
        %892 = vmatprep.mubr.bf16.mxu0 0
        %893 = vmatmul.mubr.bf16.gmra.mrb[0].mxu0 %v774
        %v894 = vpop.f32.mrb[0].mxu0
        %v895 = vadd.f32 0.0, %v894
        %v896 = vpop.f32.mrb[0].mxu0
        %v897 = vpop.f32.mrb[0].mxu0
        %v898 = vadd.f32 0.0, %v897
        %v899 = vpop.f32.mrb[0].mxu0
        %900 = vmatprep.mubr.bf16.mxu0 0
        %901 = vmatmul.mubr.bf16.gmra.mrb[0].mxu0 %v775
        %v902 = vpop.f32.mrb[0].mxu0
        %v903 = vadd.f32 0.0, %v902
        %v904 = vpop.f32.mrb[0].mxu0
        %v905 = vpop.f32.mrb[0].mxu0
        %v906 = vadd.f32 0.0, %v905
        %v907 = vpop.f32.mrb[0].mxu0
        %908 = vmatprep.mubr.bf16.mxu0 0
        %909 = vmatmul.mubr.bf16.gmra.mrb[0].mxu0 %v776
        %v910 = vpop.f32.mrb[0].mxu0
        %v911 = vadd.f32 0.0, %v910
        %v912 = vpop.f32.mrb[0].mxu0
        %v913 = vpop.f32.mrb[0].mxu0
        %v914 = vadd.f32 0.0, %v913
        %v915 = vpop.f32.mrb[0].mxu0
        %916 = vmatprep.mubr.bf16.mxu0 0
        %917 = vmatmul.mubr.bf16.gmra.mrb[0].mxu0 %v777
        %v918 = vpop.f32.mrb[0].mxu0
        %v919 = vadd.f32 0.0, %v918
        %v920 = vpop.f32.mrb[0].mxu0
        %v921 = vpop.f32.mrb[0].mxu0
        %v922 = vadd.f32 0.0, %v921
        %v923 = vpop.f32.mrb[0].mxu0
        %924 = vmatprep.mubr.bf16.mxu0 0
        %925 = vmatmul.mubr.bf16.gmra.mrb[0].mxu0 %v778
        %v926 = vpop.f32.mrb[0].mxu0
        %v927 = vadd.f32 0.0, %v926
        %v928 = vpop.f32.mrb[0].mxu0
        %v929 = vpop.f32.mrb[0].mxu0
        %v930 = vadd.f32 0.0, %v929
        %v931 = vpop.f32.mrb[0].mxu0
        %932 = vmatprep.mubr.bf16.mxu0 0
        %933 = vmatmul.mubr.bf16.gmra.mrb[0].mxu0 %v779
        %v934 = vpop.f32.mrb[0].mxu0
        %v935 = vadd.f32 0.0, %v934
        %v936 = vpop.f32.mrb[0].mxu0
        %v937 = vpop.f32.mrb[0].mxu0
        %v938 = vadd.f32 0.0, %v937
        %v939 = vpop.f32.mrb[0].mxu0
        %940 = vdwg.mxu0
        %941 = vst [vmem:[%s245] sm:$0xff] %v879
        %942 = vst [vmem:[%s245 + $0x8] sm:$0xff] %v882
        %943 = vst [vmem:[%s245 + $0x10] sm:$0xff] %v887
        %944 = vst [vmem:[%s245 + $0x18] sm:$0xff] %v890
        %945 = vst [vmem:[%s245 + $0x20] sm:$0xff] %v895
        %946 = vst [vmem:[%s245 + $0x28] sm:$0xff] %v898
        %947 = vst [vmem:[%s245 + $0x30] sm:$0xff] %v903
        %948 = vst [vmem:[%s245 + $0x38] sm:$0xff] %v906
        %949 = vst [vmem:[%s245 + $0x40] sm:$0xff] %v911
        %950 = vst [vmem:[%s245 + $0x48] sm:$0xff] %v914
        %951 = vst [vmem:[%s245 + $0x50] sm:$0xff] %v919
        %952 = vst [vmem:[%s245 + $0x58] sm:$0xff] %v922
        %953 = vst [vmem:[%s245 + $0x60] sm:$0xff] %v927
        %954 = vst [vmem:[%s245 + $0x68] sm:$0xff] %v930
        %955 = vst [vmem:[%s245 + $0x70] sm:$0xff] %v935
        %956 = vst [vmem:[%s245 + $0x78] sm:$0xff] %v938
        %s957 = sand.u32 %s159, 1
        %s958 = scalar_lea.sflag [#allocation3], %s957
        %s959 = sand.u32 %s159, 1
        %s960 = smul.addr %s959, 128
        %s961 = scalar_lea.vmem [#allocation2], %s960
        // Predicated region
        $region45: #{tpu_custom_call.1} parent=43 // pred_check
          %p962 = pneg %p169
        $region46: #{tpu_custom_call.1} parent=43 // pred_check_branch
          %964 = sbr.rel (%p962) target = $region48
        $region47: #{tpu_custom_call.1} parent=43 // pred_region
          %s965 = smul.u32 16, %s20
          %s967 = ssub.s32 2048, 2048
          %968 = vsyncadd %s958, %s967
          %s969 = smul.addr %s965, 128
          %s970 = scalar_lea.hbm %s6, %s969
          %s971 = sshll.u32 %s961, 4
          %s972 = int_to_ptr.vmem [resolvable:$true] %s971
          %977 = dma.vmem_to_hbm [thread:$0]  %s972, 2048, %s970, %s958, 128, 128, 8
        $region48: #{tpu_custom_call.1} parent=43 // pred_fallthru
          _
      $region44: #{tpu_custom_call.1} parent=5 // pred_fallthru
        _
      %p978 = scmp.le.s32.totalorder 2, %s15
      // Predicated region
      $region49: #{tpu_custom_call.1} parent=5 // pred_check
        %p979 = pneg %p978
      $region50: #{tpu_custom_call.1} parent=5 // pred_check_branch
        %981 = sbr.rel (%p979) target = $region52
      $region51: #{tpu_custom_call.1} parent=5 // pred_region
        %s982 = ssub.s32 %s15, 2
        // Predicated region
        $region53: #{tpu_custom_call.1} parent=51 // pred_check
          %p983 = pneg %p175
        $region54: #{tpu_custom_call.1} parent=51 // pred_check_branch
          %985 = sbr.rel (%p983) target = $region56
        $region55: #{tpu_custom_call.1} parent=51 // pred_region
          %s986 = sand.u32 %s160, 1
          %s987 = scalar_lea.sflag [#allocation3], %s986
          %s988 = sand.u32 %s160, 1
          %s989 = smul.addr %s988, 128
          %s990 = scalar_lea.vmem [#allocation2], %s989
          %991 = dma.done %s987, 2048
        $region56: #{tpu_custom_call.1} parent=51 // pred_fallthru
          _
      $region52: #{tpu_custom_call.1} parent=5 // pred_fallthru
        _
    $region6: #{tpu_custom_call.1} parent=1 // loop_footer
      %s19 = sadd.s32 1, %s15
    $region7: #{tpu_custom_call.1} parent=1 // loop_footer_branch
      %14 = sbr.rel target = $region3
    $region8: #{tpu_custom_call.1} parent=1 // loop_exit
      _
    %992 = vsyncpa [#allocation3], 1
    %s993 = scalar_lea.sflag [#allocation3], 1
    %994 = vsyncpa %s993, 1

</llo_original>
